<compile_context>
chip_gen: v7x
topology: tpu7x:2x2x1
jax: 0.10.0
libtpu: 0.0.40
codegen_flags: <defaults>
</compile_context>

<pallas_src>
import numpy as np
import jax
import jax.numpy as jnp
from jax.experimental import pallas as pl
from jax.experimental.pallas import tpu as pltpu

# ----------------------------- config (small) ------------------------------
B = 2
CONTEXT_LEN = 8          # backcast size L
PRED_LEN = 4             # forecast size F (horizon)
OUTPUT_SIZE_LIST = [1]
COVARIATE_SIZE = 1
N_LAYERS = 2             # hidden Linear+ReLU layers per block
HIDDEN = 32
STACK_TYPES = ['identity', 'trend', 'seasonality']
N_POLYNOMIALS = 2
N_HARMONICS = 2
POOLING_SIZES = [2, 2, 1]
NAIVE_LEVEL = True

N_BLOCKS = len(STACK_TYPES)
N_LAYERS_TOTAL = N_LAYERS + 1
OUT_WIDTH = CONTEXT_LEN + PRED_LEN       # [backcast | forecast] = 12
F_PAD = HIDDEN                           # per-block lane stride = 32


def _round_up(x, m):
    return ((x + m - 1) // m) * m


PACK_ROWS = _round_up(N_BLOCKS * B, 8)            # 6 -> 8 sublanes (one vreg)
PACK_LANES = _round_up(N_BLOCKS * F_PAD, 128)     # 96 -> 128 lanes (one vreg)


# ------------------------- basis construction (numpy) ----------------------
def linear_interp_matrix(in_size, out_size):
    """M (in,out) s.t. knots @ M == F.interpolate(knots, out, 'linear',
    align_corners=False). Identity when in_size == out_size."""
    M = np.zeros((in_size, out_size), dtype=np.float32)
    scale = in_size / out_size
    for j in range(out_size):
        src = max((j + 0.5) * scale - 0.5, 0.0)
        i0 = min(int(np.floor(src)), in_size - 1)
        i1 = min(i0 + 1, in_size - 1)
        w = src - i0
        M[i0, j] += 1.0 - w
        M[i1, j] += w
    return M


def make_basis(stack_type):
    """Returns (n_theta, Bb, Bf) with backcast = theta @ Bb, forecast = theta @ Bf."""
    L, F = CONTEXT_LEN, PRED_LEN
    if stack_type == 'identity':
        n_theta = L + F
        knots = F
        Bb = np.concatenate([np.eye(L, dtype=np.float32),
                             np.zeros((knots, L), np.float32)], axis=0)
        Bf = np.concatenate([np.zeros((L, F), np.float32),
                             linear_interp_matrix(knots, F)], axis=0)
    elif stack_type == 'trend':
        poly = N_POLYNOMIALS + 1
        n_theta = poly
        tb = np.arange(L, dtype=np.float64) / L
        tf = np.arange(F, dtype=np.float64) / F
        Bb = np.stack([tb ** i for i in range(poly)], 0).astype(np.float32)
        fore_basis = np.stack([tf ** i for i in range(poly)], 0).astype(np.float32)
        Bf = (fore_basis @ linear_interp_matrix(F, F)).astype(np.float32)
    elif stack_type == 'seasonality':
        # Exactly the PyTorch SeasonalityBasis templates.  n_theta (the
        # harmonic size) is derived directly from the frequency grid so both
        # always use the same horizon (forecast_size == PRED_LEN).
        freq = np.append(np.zeros(1),
                         np.arange(N_HARMONICS, N_HARMONICS / 2 * F, dtype=float)
                         / N_HARMONICS)[None, :]
        n_theta = 2 * freq.shape[1]
        back_grid = -2 * np.pi * (np.arange(L, dtype=float)[:, None] / F) * freq
        fore_grid = 2 * np.pi * (np.arange(F, dtype=float)[:, None] / F) * freq
        Bb = np.concatenate([np.cos(back_grid).T, np.sin(back_grid).T],
                            axis=0).astype(np.float32)
        fore_basis = np.concatenate([np.cos(fore_grid).T, np.sin(fore_grid).T],
                                    axis=0).astype(np.float32)
        # F.interpolate(mode='linear', same size) is the identity -> fold exact.
        Bf = (fore_basis @ linear_interp_matrix(F, F)).astype(np.float32)
    else:
        raise ValueError(stack_type)
    return n_theta, Bb, Bf


# ------------------------------- parameters --------------------------------
def build_params(key):
    """Per-block random params (kept raw for the pure-JAX reference) plus the
    block-diagonal packed weight/bias stacks consumed by the fused kernel."""
    raw_blocks = []
    W_pack = np.zeros((N_LAYERS_TOTAL, PACK_LANES, PACK_LANES), np.float32)
    b_pack = np.zeros((N_LAYERS_TOTAL, PACK_ROWS, PACK_LANES), np.float32)
    f_ins = []
    for bi, (st, p) in enumerate(zip(STACK_TYPES, POOLING_SIZES)):
        Lp = int(np.ceil(CONTEXT_LEN / p))
        f_in = Lp * len(OUTPUT_SIZE_LIST) + (CONTEXT_LEN + PRED_LEN) * COVARIATE_SIZE
        f_ins.append(f_in)
        n_theta, Bb, Bf = make_basis(st)
        dims = [f_in] + [HIDDEN] * N_LAYERS
        col0 = bi * F_PAD
        rows = slice(bi * B, (bi + 1) * B)
        layers = []
        for l in range(N_LAYERS):
            key, k1, k2 = jax.random.split(key, 3)
            bound = 1.0 / np.sqrt(dims[l])
            W = jax.random.uniform(k1, (dims[l], dims[l + 1]), jnp.float32,
                                   -bound, bound)
            bvec = jax.random.uniform(k2, (1, dims[l + 1]), jnp.float32,
                                      -bound, bound)
            layers.append((W, bvec))
            # block-diagonal placement, batch rows share the bias
            W_pack[l, col0:col0 + dims[l], col0:col0 + dims[l + 1]] = np.asarray(W)
            b_pack[l, rows, col0:col0 + dims[l + 1]] = np.asarray(bvec)
        key, k1, k2 = jax.random.split(key, 3)
        bound = 1.0 / np.sqrt(dims[-1])
        wout = jax.random.uniform(k1, (dims[-1], n_theta), jnp.float32, -bound, bound)
        bout = jax.random.uniform(k2, (1, n_theta), jnp.float32, -bound, bound)
        # Offline fold: theta@[Bb|Bf] == h@(Wout@[Bb|Bf]) + bout@[Bb|Bf]
        BbBf = np.concatenate([Bb, Bf], axis=1)               # (n_theta, L+F)
        # tail maps every block's hidden slice -> output lanes [0, L+F)
        W_pack[N_LAYERS, col0:col0 + HIDDEN, :OUT_WIDTH] = np.asarray(wout) @ BbBf
        b_pack[N_LAYERS, rows, :OUT_WIDTH] = np.asarray(bout) @ BbBf
        raw_blocks.append(dict(pool=p, f_in=f_in, layers=layers,
                               wout=wout, bout=bout,
                               Bb=jnp.asarray(Bb), Bf=jnp.asarray(Bf)))
    return raw_blocks, jnp.asarray(W_pack), jnp.asarray(b_pack), f_ins, key


# ------------------------------ Pallas kernel -------------------------------
def nbeats_fused_kernel(feats_ref, w_ref, b_ref, out_ref):
    """Single invocation; all blocks packed into one vreg-shaped slab.
       feats_ref: (PACK_ROWS, PACK_LANES)  row = block*B + batch, block lanes offset
       w_ref:     (N_LAYERS+1, PACK_LANES, PACK_LANES) block-diag layers + folded tail
       b_ref:     (N_LAYERS+1, PACK_ROWS, PACK_LANES)  per-row biases
       out_ref:   (PACK_ROWS, PACK_LANES)  [backcast|forecast] in lanes [0, OUT_WIDTH)
    """
    biases = b_ref[...]                      # load all biases once
    h = feats_ref[...]                       # (8, 128) -- one vreg
    for l in range(N_LAYERS):                # static unroll; 1 MXU matmul / layer
        h = jnp.maximum(
            jnp.dot(h, w_ref[l], preferred_element_type=jnp.float32) + biases[l],
            0.0)
    # folded projection + basis; full lane-dense (8,128) store, sliced in wrapper
    out_ref[...] = (jnp.dot(h, w_ref[N_LAYERS], preferred_element_type=jnp.float32)
                    + biases[N_LAYERS])


def run_fused(feats_packed, w_pack, b_pack):
    """One pallas_call, no grid: everything resident in VMEM at once."""
    vmem = pl.BlockSpec(memory_space=pltpu.MemorySpace.VMEM)
    return pl.pallas_call(
        nbeats_fused_kernel,
        in_specs=[vmem, vmem, vmem],
        out_specs=vmem,
        out_shape=jax.ShapeDtypeStruct((PACK_ROWS, PACK_LANES), jnp.float32),
    )(feats_packed, w_pack, b_pack)


# ---------------------------- forward (JAX glue) ----------------------------
def _level_and_covs(x, y):
    Bsz = y.shape[0]
    encoder_x_t = x[:, :-1, :]
    decoder_x_t = x[:, -1:, :]
    level = y[:, -1:, :]                                       # (B, 1, C)
    forecast_level = jnp.repeat(jnp.repeat(level, PRED_LEN, axis=1),
                                np.array(OUTPUT_SIZE_LIST), axis=2)
    covs_flat = jnp.concatenate([encoder_x_t.reshape(Bsz, -1),
                                 decoder_x_t.reshape(Bsz, -1)], axis=1)
    return level, forecast_level, covs_flat


def _pool_feats(residuals, p):
    """MaxPool1d(kernel=stride=p, ceil_mode=True) on (B, L, C), flattened."""
    Bsz = residuals.shape[0]
    Lp = int(np.ceil(CONTEXT_LEN / p))
    ey = jnp.transpose(residuals, (0, 2, 1))                   # (B, C, L)  NCL
    pad = Lp * p - CONTEXT_LEN
    if pad:
        ey = jnp.pad(ey, ((0, 0), (0, 0), (0, pad)), constant_values=-jnp.inf)
    pooled = ey.reshape(Bsz, residuals.shape[2], Lp, p).max(axis=-1)
    return jnp.transpose(pooled, (0, 2, 1)).reshape(Bsz, -1)   # (B, Lp*C)


def _pack_feats(residuals, covs_flat, f_ins):
    """Build the (PACK_ROWS, PACK_LANES) block-offset feature slab.
    Each distinct pooling size is computed exactly once."""
    pooled = {p: _pool_feats(residuals, p) for p in sorted(set(POOLING_SIZES))}
    rows = []
    for bi, p in enumerate(POOLING_SIZES):
        f = jnp.concatenate([pooled[p], covs_flat], axis=1)    # (B, f_in)
        assert f.shape[1] == f_ins[bi]
        col0 = bi * F_PAD
        rows.append(jnp.pad(f, ((0, 0), (col0, PACK_LANES - col0 - f.shape[1]))))
    packed = jnp.concatenate(rows, axis=0)                     # (N_BLOCKS*B, 128)
    return jnp.pad(packed, ((0, PACK_ROWS - packed.shape[0]), (0, 0)))


def nbeats_forward(x, y, w_pack, b_pack, f_ins):
    """x: (B, L+F, covariate_size); y: (B, L, 1)."""
    Bsz = y.shape[0]
    nch = len(OUTPUT_SIZE_LIST)
    encoder_y = y
    residuals = encoder_y      # NBEATSModule keeps residuals fixed (no update)

    level, forecast_level, covs_flat = _level_and_covs(x, y)
    feats_packed = _pack_feats(residuals, covs_flat, f_ins)

    out = run_fused(feats_packed, w_pack, b_pack)              # (8, 128)

    # un-pack all blocks with one reshape + one transpose (no per-block loop)
    slab = out[:N_BLOCKS * B, :OUT_WIDTH].reshape(N_BLOCKS, Bsz, OUT_WIDTH)
    backs = slab[:, :, :CONTEXT_LEN].reshape(N_BLOCKS, Bsz, nch, CONTEXT_LEN)
    backs = jnp.transpose(backs, (1, 3, 2, 0))                 # (B, L, nch, n_blocks)
    fores = slab[:, :, CONTEXT_LEN:].reshape(N_BLOCKS, Bsz,
                                             sum(OUTPUT_SIZE_LIST), PRED_LEN)
    fores = jnp.transpose(fores, (1, 3, 2, 0))                 # (B, F, nch, n_blocks)

    if NAIVE_LEVEL:
        forecast = forecast_level + jnp.sum(fores, axis=-1)
        naive_back = jnp.repeat(level, CONTEXT_LEN, axis=1)
        block_forecasts = jnp.concatenate([forecast_level[..., None], fores], axis=-1)
        block_backcasts = jnp.concatenate([naive_back[..., None], backs], axis=-1)
    else:
        forecast = jnp.sum(fores, axis=-1)
        block_forecasts = fores
        block_backcasts = backs

    backcast = encoder_y - residuals                           # == 0 by design
    return forecast, backcast, block_backcasts, block_forecasts


# ------------------------- pure-JAX reference (unfused) ---------------------
def _mm_hi(a, b):
    # HIGHEST precision only on the reference path (kernel uses default MXU).
    return jnp.dot(a, b, precision=jax.lax.Precision.HIGHEST)


def nbeats_forward_ref(x, y, raw_blocks):
    Bsz = y.shape[0]
    encoder_y = y
    residuals = encoder_y
    level, forecast_level, covs_flat = _level_and_covs(x, y)
    block_forecasts = [forecast_level]
    block_backcasts = [jnp.repeat(level, CONTEXT_LEN, axis=1)]
    forecast = forecast_level
    for blk in raw_blocks:
        pooled = _pool_feats(residuals, blk['pool'])
        h = jnp.concatenate([pooled, covs_flat], axis=1)
        for (W, bvec) in blk['layers']:
            h = jnp.maximum(_mm_hi(h, W) + bvec, 0.0)
        theta = _mm_hi(h, blk['wout']) + blk['bout']
        back = _mm_hi(theta, blk['Bb'])
        fore = _mm_hi(theta, blk['Bf'])
        back = jnp.transpose(back.reshape(Bsz, len(OUTPUT_SIZE_LIST),
                                          CONTEXT_LEN), (0, 2, 1))
        fore = jnp.transpose(fore.reshape(Bsz, sum(OUTPUT_SIZE_LIST),
                                          PRED_LEN), (0, 2, 1))
        forecast = forecast + fore
        block_forecasts.append(fore)
        block_backcasts.append(back)
    return (forecast, encoder_y - residuals,
            jnp.stack(block_backcasts, axis=-1),
            jnp.stack(block_forecasts, axis=-1))


# ----------------------------------- main -----------------------------------
if __name__ == "__main__":
    key = jax.random.PRNGKey(0)
    raw_blocks, w_pack, b_pack, f_ins, key = build_params(key)

    kx, ky = jax.random.split(key)
    x = jax.random.normal(kx, (B, CONTEXT_LEN + PRED_LEN, COVARIATE_SIZE),
                          jnp.float32)
    y = jax.random.normal(ky, (B, CONTEXT_LEN, len(OUTPUT_SIZE_LIST)), jnp.float32)

    forward_jit = jax.jit(lambda xx, yy: nbeats_forward(xx, yy, w_pack, b_pack, f_ins))
    outs = jax.block_until_ready(forward_jit(x, y))
    forecast, backcast, block_backcasts, block_forecasts = outs

    # shape / sanity checks
    assert forecast.shape == (B, PRED_LEN, sum(OUTPUT_SIZE_LIST))
    assert backcast.shape == (B, CONTEXT_LEN, len(OUTPUT_SIZE_LIST))
    assert block_backcasts.shape == (B, CONTEXT_LEN, len(OUTPUT_SIZE_LIST),
                                     1 + N_BLOCKS)
    assert block_forecasts.shape == (B, PRED_LEN, sum(OUTPUT_SIZE_LIST),
                                     1 + N_BLOCKS)
    assert bool(jnp.all(jnp.isfinite(forecast)))
    assert bool(jnp.allclose(backcast, 0.0))   # residuals are never updated

    # numerical check vs. the unfused pure-JAX reference (fold exactness).
    # Tolerance sized for default (single-pass bf16) MXU precision inside the
    # kernel vs. a HIGHEST-precision reference on O(1) activations.
    refs = nbeats_forward_ref(x, y, raw_blocks)
    for got, ref in zip(outs, refs):
        assert got.shape == ref.shape
        assert bool(jnp.allclose(got, ref, atol=5e-2, rtol=5e-2)), (
            float(jnp.max(jnp.abs(got - ref))))

    print("KERNEL_OK")
</pallas_src>

<mosaic_0001>
module attributes {stable_mosaic.version = 11 : i64} {
  func.func @nbeats_fused_kernel(%arg0: memref<8x128xf32, #tpu.memory_space<vmem>>, %arg1: memref<3x128x128xf32, #tpu.memory_space<vmem>>, %arg2: memref<3x8x128xf32, #tpu.memory_space<vmem>>, %arg3: memref<8x128xf32, #tpu.memory_space<vmem>>) attributes {dimension_semantics = [], scalar_prefetch = 0 : i64, scratch_operands = 0 : i64, tpu.core_type = #tpu.core_type<tc>} {
    %c0 = arith.constant 0 : index
    %c0_0 = arith.constant 0 : index
    %c0_1 = arith.constant 0 : index
    %0 = vector.load %arg2[%c0, %c0_0, %c0_1] : memref<3x8x128xf32, #tpu.memory_space<vmem>>, vector<3x8x128xf32>
    %c0_2 = arith.constant 0 : index
    %c0_3 = arith.constant 0 : index
    %1 = vector.load %arg0[%c0_2, %c0_3] : memref<8x128xf32, #tpu.memory_space<vmem>>, vector<8x128xf32>
    %c0_4 = arith.constant 0 : index
    %c0_5 = arith.constant 0 : index
    %c0_6 = arith.constant 0 : index
    %2 = vector.load %arg1[%c0_4, %c0_5, %c0_6] : memref<3x128x128xf32, #tpu.memory_space<vmem>>, vector<1x128x128xf32>
    %3 = vector.shape_cast %2 : vector<1x128x128xf32> to vector<128x128xf32>
    %cst = arith.constant dense<0.000000e+00> : vector<8x128xf32>
    %4 = tpu.matmul %1, %3, %cst {dimension_numbers = #tpu.dot_dimension_numbers<[1], [0], [0], [1], [0, 0, 1, 1], [], []>} : vector<8x128xf32>, vector<128x128xf32>, vector<8x128xf32> -> vector<8x128xf32>
    %5 = vector.extract_strided_slice %0 {offsets = [0, 0, 0], sizes = [1, 8, 128], strides = [1, 1, 1]} : vector<3x8x128xf32> to vector<1x8x128xf32>
    %6 = vector.shape_cast %5 : vector<1x8x128xf32> to vector<8x128xf32>
    %7 = arith.addf %4, %6 : vector<8x128xf32>
    %cst_7 = arith.constant 0.000000e+00 : f32
    %8 = vector.broadcast %cst_7 : f32 to vector<8x128xf32>
    %9 = arith.maximumf %7, %8 : vector<8x128xf32>
    %c1 = arith.constant 1 : index
    %c0_8 = arith.constant 0 : index
    %c0_9 = arith.constant 0 : index
    %10 = vector.load %arg1[%c1, %c0_8, %c0_9] : memref<3x128x128xf32, #tpu.memory_space<vmem>>, vector<1x128x128xf32>
    %11 = vector.shape_cast %10 : vector<1x128x128xf32> to vector<128x128xf32>
    %cst_10 = arith.constant dense<0.000000e+00> : vector<8x128xf32>
    %12 = tpu.matmul %9, %11, %cst_10 {dimension_numbers = #tpu.dot_dimension_numbers<[1], [0], [0], [1], [0, 0, 1, 1], [], []>} : vector<8x128xf32>, vector<128x128xf32>, vector<8x128xf32> -> vector<8x128xf32>
    %13 = vector.extract_strided_slice %0 {offsets = [1, 0, 0], sizes = [1, 8, 128], strides = [1, 1, 1]} : vector<3x8x128xf32> to vector<1x8x128xf32>
    %14 = vector.shape_cast %13 : vector<1x8x128xf32> to vector<8x128xf32>
    %15 = arith.addf %12, %14 : vector<8x128xf32>
    %cst_11 = arith.constant 0.000000e+00 : f32
    %16 = vector.broadcast %cst_11 : f32 to vector<8x128xf32>
    %17 = arith.maximumf %15, %16 : vector<8x128xf32>
    %c2 = arith.constant 2 : index
    %c0_12 = arith.constant 0 : index
    %c0_13 = arith.constant 0 : index
    %18 = vector.load %arg1[%c2, %c0_12, %c0_13] : memref<3x128x128xf32, #tpu.memory_space<vmem>>, vector<1x128x128xf32>
    %19 = vector.shape_cast %18 : vector<1x128x128xf32> to vector<128x128xf32>
    %cst_14 = arith.constant dense<0.000000e+00> : vector<8x128xf32>
    %20 = tpu.matmul %17, %19, %cst_14 {dimension_numbers = #tpu.dot_dimension_numbers<[1], [0], [0], [1], [0, 0, 1, 1], [], []>} : vector<8x128xf32>, vector<128x128xf32>, vector<8x128xf32> -> vector<8x128xf32>
    %21 = vector.extract_strided_slice %0 {offsets = [2, 0, 0], sizes = [1, 8, 128], strides = [1, 1, 1]} : vector<3x8x128xf32> to vector<1x8x128xf32>
    %22 = vector.shape_cast %21 : vector<1x8x128xf32> to vector<8x128xf32>
    %23 = arith.addf %20, %22 : vector<8x128xf32>
    %c0_15 = arith.constant 0 : index
    %c0_16 = arith.constant 0 : index
    %24 = vector.load %arg3[%c0_15, %c0_16] : memref<8x128xf32, #tpu.memory_space<vmem>>, vector<8x128xf32>
    tpu.vector_store %arg3[%c0_15, %c0_16], %23 {strides = array<i32>} : memref<8x128xf32, #tpu.memory_space<vmem>>, vector<8x128xf32>,
    return
  }
}

</mosaic_0001>

<llo_original>
// kernel: _lambda_.1
$region0: #{_lambda_.1}
  #allocation0 [shape = 'u32[]', space=smem, size = 0x4, offset = 0x4, fixed_abs, tag = 'smem constant byte address 0x4 - core index']
  #allocation1 [shape = 'u32[144,128]{1,0:T(1,128)}', space=vmem, size = 0x12000, scoped, tag = 'internal scratch']
  %s0 = inlined_call_operand.vmem [shape: f32[8,128], index: 0, kind: input, shape index: {}]
  %s1 = inlined_call_operand.hbm [shape: f32[3,128,128], index: 1, kind: input, shape index: {}]
  %s2 = inlined_call_operand.vmem [shape: f32[3,8,128], index: 2, kind: input, shape index: {}]
  %s3 = inlined_call_operand.vmem [shape: f32[8,128], index: 3, kind: output, shape index: {}]
  %s4 = sld [smem:[#allocation0]]
  $region26: #{_lambda_.1} parent=0
    _
  %s6 = ssub.s32 1, %s4
  %s7 = scalar_select 0, %s6, %s4
  $region1: #{_lambda_.1} parent=0
    #allocation2 [shape = 'u8[196608]{0}', space=vmem, size = 0x30000, scoped, tag = 'input window, operand 1, single buffered']
    #allocation3 [shape = 's32[1]{0}', space=sflag, size = 0x4, scoped, tag = 'scoped memory for _lambda_.1']
    %8 = vsyncpa [#allocation3], 0
    // Predicated region
    $region2: #{_lambda_.1} parent=1 // pred_check
      _
    $region3: #{_lambda_.1} parent=1 // pred_check_branch
      %10 = sbr.rel (0) target = $region5
    $region4: #{_lambda_.1} parent=1 // pred_region
      _
    $region5: #{_lambda_.1} parent=1 // pred_fallthru
      _
    // Predicated region
    $region6: #{_lambda_.1} parent=1 // pred_check
      _
    $region7: #{_lambda_.1} parent=1 // pred_check_branch
      %12 = sbr.rel (0) target = $region9
    $region8: #{_lambda_.1} parent=1 // pred_region
      %s14 = ssub.s32 6144, 6144
      %15 = vsyncadd [#allocation3], %s14
      %s16 = sshll.u32 [#allocation2], 4
      %s17 = int_to_ptr.vmem [resolvable:$true] %s16
      %22 = dma.hbm_to_vmem [thread:$0]  %s1, 6144, %s17, [#allocation3], 128, 128, 8
    $region9: #{_lambda_.1} parent=1 // pred_fallthru
      _
    // Predicated region
    $region10: #{_lambda_.1} parent=1 // pred_check
      _
    $region11: #{_lambda_.1} parent=1 // pred_check_branch
      %24 = sbr.rel (0) target = $region13
    $region12: #{_lambda_.1} parent=1 // pred_region
      _
    $region13: #{_lambda_.1} parent=1 // pred_fallthru
      _
    // Predicated region
    $region14: #{_lambda_.1} parent=1 // pred_check
      _
    $region15: #{_lambda_.1} parent=1 // pred_check_branch
      %26 = sbr.rel (0) target = $region17
    $region16: #{_lambda_.1} parent=1 // pred_region
      %27 = dma.done [#allocation3], 6144
    $region17: #{_lambda_.1} parent=1 // pred_fallthru
      _
    %v28 = vld [vmem:[%s2] sm:$0xff]
    %v29 = vld [vmem:[%s2 + $0x8] sm:$0xff]
    %v30 = vld [vmem:[%s2 + $0x10] sm:$0xff]
    %v31 = vld [vmem:[%s0] sm:$0xff]
    %v32 = vld [vmem:[#allocation2] sm:$0xff]
    %v33 = vld [vmem:[#allocation2 + $0x8] sm:$0xff]
    %v34 = vld [vmem:[#allocation2 + $0x10] sm:$0xff]
    %v35 = vld [vmem:[#allocation2 + $0x18] sm:$0xff]
    %v36 = vld [vmem:[#allocation2 + $0x20] sm:$0xff]
    %v37 = vld [vmem:[#allocation2 + $0x28] sm:$0xff]
    %v38 = vld [vmem:[#allocation2 + $0x30] sm:$0xff]
    %v39 = vld [vmem:[#allocation2 + $0x38] sm:$0xff]
    %v40 = vld [vmem:[#allocation2 + $0x40] sm:$0xff]
    %v41 = vld [vmem:[#allocation2 + $0x48] sm:$0xff]
    %v42 = vld [vmem:[#allocation2 + $0x50] sm:$0xff]
    %v43 = vld [vmem:[#allocation2 + $0x58] sm:$0xff]
    %v44 = vld [vmem:[#allocation2 + $0x60] sm:$0xff]
    %v45 = vld [vmem:[#allocation2 + $0x68] sm:$0xff]
    %v46 = vld [vmem:[#allocation2 + $0x70] sm:$0xff]
    %v47 = vld [vmem:[#allocation2 + $0x78] sm:$0xff]
    %48 = vmatprep.subr.mxu0 0.0
    %49 = vmatpush1.msra.mxu0 %v32
    %50 = vmatprep.subr.mxu0 0.0
    %51 = vmatpush1.msra.mxu0 %v33
    %52 = vmatprep.subr.mxu0 0.0
    %53 = vmatpush1.msra.mxu0 %v34
    %54 = vmatprep.subr.mxu0 0.0
    %55 = vmatpush1.msra.mxu0 %v35
    %56 = vmatprep.subr.mxu0 0.0
    %57 = vmatpush1.msra.mxu0 %v36
    %58 = vmatprep.subr.mxu0 0.0
    %59 = vmatpush1.msra.mxu0 %v37
    %60 = vmatprep.subr.mxu0 0.0
    %61 = vmatpush1.msra.mxu0 %v38
    %62 = vmatprep.subr.mxu0 0.0
    %63 = vmatpush1.msra.mxu0 %v39
    %64 = vmatprep.subr.mxu0 0.0
    %65 = vmatpush1.msra.mxu0 %v40
    %66 = vmatprep.subr.mxu0 0.0
    %67 = vmatpush1.msra.mxu0 %v41
    %68 = vmatprep.subr.mxu0 0.0
    %69 = vmatpush1.msra.mxu0 %v42
    %70 = vmatprep.subr.mxu0 0.0
    %71 = vmatpush1.msra.mxu0 %v43
    %72 = vmatprep.subr.mxu0 0.0
    %73 = vmatpush1.msra.mxu0 %v44
    %74 = vmatprep.subr.mxu0 0.0
    %75 = vmatpush1.msra.mxu0 %v45
    %76 = vmatprep.subr.mxu0 0.0
    %77 = vmatpush1.msra.mxu0 %v46
    %78 = vmatprep.subr.mxu0 0.0
    %79 = vmatpush1.msra.mxu0 %v47
    %80 = vmatprep.subr.mxu0 0.0
    %81 = vmatpush1.msra.mxu0 0.0
    %82 = vmatprep.subr.mxu0 0.0
    %83 = vmatpush1.msra.mxu0 0.0
    %84 = vmatprep.subr.mxu0 0.0
    %85 = vmatpush1.msra.mxu0 0.0
    %86 = vmatprep.subr.mxu0 0.0
    %87 = vmatpush1.msra.mxu0 0.0
    %88 = vmatprep.subr.mxu0 0.0
    %89 = vmatpush1.msra.mxu0 0.0
    %90 = vmatprep.subr.mxu0 0.0
    %91 = vmatpush1.msra.mxu0 0.0
    %92 = vmatprep.subr.mxu0 0.0
    %93 = vmatpush1.msra.mxu0 0.0
    %94 = vmatprep.subr.mxu0 0.0
    %95 = vmatpush1.msra.mxu0 0.0
    %96 = vmatprep.subr.mxu0 0.0
    %97 = vmatpush1.msra.mxu0 0.0
    %98 = vmatprep.subr.mxu0 0.0
    %99 = vmatpush1.msra.mxu0 0.0
    %100 = vmatprep.subr.mxu0 0.0
    %101 = vmatpush1.msra.mxu0 0.0
    %102 = vmatprep.subr.mxu0 0.0
    %103 = vmatpush1.msra.mxu0 0.0
    %104 = vmatprep.subr.mxu0 0.0
    %105 = vmatpush1.msra.mxu0 0.0
    %106 = vmatprep.subr.mxu0 0.0
    %107 = vmatpush1.msra.mxu0 0.0
    %108 = vmatprep.subr.mxu0 0.0
    %109 = vmatpush1.msra.mxu0 0.0
    %110 = vmatprep.subr.mxu0 0.0
    %111 = vmatpush1.msra.mxu0 0.0
    %112 = vmatprep.mubr.f32.mxu0 0.0
    %113 = vmatmul.mubr.f32.gmra.mrb[0].mxu0 %v31
    %v114 = vpop.f32.mrb[0].mxu0
    %v115 = vadd.f32 %v28, %v114
    %v116 = vpop.f32.mrb[0].mxu0
    %117 = vdwg.mxu0
    %v118 = vmax.f32 %v115, 0.0
    %s119 = scalar_lea.vmem [#allocation2], 128
    %v120 = vld [vmem:[%s119] sm:$0xff]
    %v121 = vld [vmem:[%s119 + $0x8] sm:$0xff]
    %v122 = vld [vmem:[%s119 + $0x10] sm:$0xff]
    %v123 = vld [vmem:[%s119 + $0x18] sm:$0xff]
    %v124 = vld [vmem:[%s119 + $0x20] sm:$0xff]
    %v125 = vld [vmem:[%s119 + $0x28] sm:$0xff]
    %v126 = vld [vmem:[%s119 + $0x30] sm:$0xff]
    %v127 = vld [vmem:[%s119 + $0x38] sm:$0xff]
    %v128 = vld [vmem:[%s119 + $0x40] sm:$0xff]
    %v129 = vld [vmem:[%s119 + $0x48] sm:$0xff]
    %v130 = vld [vmem:[%s119 + $0x50] sm:$0xff]
    %v131 = vld [vmem:[%s119 + $0x58] sm:$0xff]
    %v132 = vld [vmem:[%s119 + $0x60] sm:$0xff]
    %v133 = vld [vmem:[%s119 + $0x68] sm:$0xff]
    %v134 = vld [vmem:[%s119 + $0x70] sm:$0xff]
    %v135 = vld [vmem:[%s119 + $0x78] sm:$0xff]
    %136 = vmatprep.subr.mxu0 0.0
    %137 = vmatpush1.msra.mxu0 %v120
    %138 = vmatprep.subr.mxu0 0.0
    %139 = vmatpush1.msra.mxu0 %v121
    %140 = vmatprep.subr.mxu0 0.0
    %141 = vmatpush1.msra.mxu0 %v122
    %142 = vmatprep.subr.mxu0 0.0
    %143 = vmatpush1.msra.mxu0 %v123
    %144 = vmatprep.subr.mxu0 0.0
    %145 = vmatpush1.msra.mxu0 %v124
    %146 = vmatprep.subr.mxu0 0.0
    %147 = vmatpush1.msra.mxu0 %v125
    %148 = vmatprep.subr.mxu0 0.0
    %149 = vmatpush1.msra.mxu0 %v126
    %150 = vmatprep.subr.mxu0 0.0
    %151 = vmatpush1.msra.mxu0 %v127
    %152 = vmatprep.subr.mxu0 0.0
    %153 = vmatpush1.msra.mxu0 %v128
    %154 = vmatprep.subr.mxu0 0.0
    %155 = vmatpush1.msra.mxu0 %v129
    %156 = vmatprep.subr.mxu0 0.0
    %157 = vmatpush1.msra.mxu0 %v130
    %158 = vmatprep.subr.mxu0 0.0
    %159 = vmatpush1.msra.mxu0 %v131
    %160 = vmatprep.subr.mxu0 0.0
    %161 = vmatpush1.msra.mxu0 %v132
    %162 = vmatprep.subr.mxu0 0.0
    %163 = vmatpush1.msra.mxu0 %v133
    %164 = vmatprep.subr.mxu0 0.0
    %165 = vmatpush1.msra.mxu0 %v134
    %166 = vmatprep.subr.mxu0 0.0
    %167 = vmatpush1.msra.mxu0 %v135
    %168 = vmatprep.subr.mxu0 0.0
    %169 = vmatpush1.msra.mxu0 0.0
    %170 = vmatprep.subr.mxu0 0.0
    %171 = vmatpush1.msra.mxu0 0.0
    %172 = vmatprep.subr.mxu0 0.0
    %173 = vmatpush1.msra.mxu0 0.0
    %174 = vmatprep.subr.mxu0 0.0
    %175 = vmatpush1.msra.mxu0 0.0
    %176 = vmatprep.subr.mxu0 0.0
    %177 = vmatpush1.msra.mxu0 0.0
    %178 = vmatprep.subr.mxu0 0.0
    %179 = vmatpush1.msra.mxu0 0.0
    %180 = vmatprep.subr.mxu0 0.0
    %181 = vmatpush1.msra.mxu0 0.0
    %182 = vmatprep.subr.mxu0 0.0
    %183 = vmatpush1.msra.mxu0 0.0
    %184 = vmatprep.subr.mxu0 0.0
    %185 = vmatpush1.msra.mxu0 0.0
    %186 = vmatprep.subr.mxu0 0.0
    %187 = vmatpush1.msra.mxu0 0.0
    %188 = vmatprep.subr.mxu0 0.0
    %189 = vmatpush1.msra.mxu0 0.0
    %190 = vmatprep.subr.mxu0 0.0
    %191 = vmatpush1.msra.mxu0 0.0
    %192 = vmatprep.subr.mxu0 0.0
    %193 = vmatpush1.msra.mxu0 0.0
    %194 = vmatprep.subr.mxu0 0.0
    %195 = vmatpush1.msra.mxu0 0.0
    %196 = vmatprep.subr.mxu0 0.0
    %197 = vmatpush1.msra.mxu0 0.0
    %198 = vmatprep.subr.mxu0 0.0
    %199 = vmatpush1.msra.mxu0 0.0
    %200 = vmatprep.mubr.f32.mxu0 0.0
    %201 = vmatmul.mubr.f32.gmra.mrb[0].mxu0 %v118
    %v202 = vpop.f32.mrb[0].mxu0
    %v203 = vadd.f32 %v29, %v202
    %v204 = vpop.f32.mrb[0].mxu0
    %205 = vdwg.mxu0
    %v206 = vmax.f32 %v203, 0.0
    %s207 = scalar_lea.vmem [#allocation2], 256
    %v208 = vld [vmem:[%s207] sm:$0xff]
    %v209 = vld [vmem:[%s207 + $0x8] sm:$0xff]
    %v210 = vld [vmem:[%s207 + $0x10] sm:$0xff]
    %v211 = vld [vmem:[%s207 + $0x18] sm:$0xff]
    %v212 = vld [vmem:[%s207 + $0x20] sm:$0xff]
    %v213 = vld [vmem:[%s207 + $0x28] sm:$0xff]
    %v214 = vld [vmem:[%s207 + $0x30] sm:$0xff]
    %v215 = vld [vmem:[%s207 + $0x38] sm:$0xff]
    %v216 = vld [vmem:[%s207 + $0x40] sm:$0xff]
    %v217 = vld [vmem:[%s207 + $0x48] sm:$0xff]
    %v218 = vld [vmem:[%s207 + $0x50] sm:$0xff]
    %v219 = vld [vmem:[%s207 + $0x58] sm:$0xff]
    %v220 = vld [vmem:[%s207 + $0x60] sm:$0xff]
    %v221 = vld [vmem:[%s207 + $0x68] sm:$0xff]
    %v222 = vld [vmem:[%s207 + $0x70] sm:$0xff]
    %v223 = vld [vmem:[%s207 + $0x78] sm:$0xff]
    %224 = vmatprep.subr.mxu0 0.0
    %225 = vmatpush1.msra.mxu0 %v208
    %226 = vmatprep.subr.mxu0 0.0
    %227 = vmatpush1.msra.mxu0 %v209
    %228 = vmatprep.subr.mxu0 0.0
    %229 = vmatpush1.msra.mxu0 %v210
    %230 = vmatprep.subr.mxu0 0.0
    %231 = vmatpush1.msra.mxu0 %v211
    %232 = vmatprep.subr.mxu0 0.0
    %233 = vmatpush1.msra.mxu0 %v212
    %234 = vmatprep.subr.mxu0 0.0
    %235 = vmatpush1.msra.mxu0 %v213
    %236 = vmatprep.subr.mxu0 0.0
    %237 = vmatpush1.msra.mxu0 %v214
    %238 = vmatprep.subr.mxu0 0.0
    %239 = vmatpush1.msra.mxu0 %v215
    %240 = vmatprep.subr.mxu0 0.0
    %241 = vmatpush1.msra.mxu0 %v216
    %242 = vmatprep.subr.mxu0 0.0
    %243 = vmatpush1.msra.mxu0 %v217
    %244 = vmatprep.subr.mxu0 0.0
    %245 = vmatpush1.msra.mxu0 %v218
    %246 = vmatprep.subr.mxu0 0.0
    %247 = vmatpush1.msra.mxu0 %v219
    %248 = vmatprep.subr.mxu0 0.0
    %249 = vmatpush1.msra.mxu0 %v220
    %250 = vmatprep.subr.mxu0 0.0
    %251 = vmatpush1.msra.mxu0 %v221
    %252 = vmatprep.subr.mxu0 0.0
    %253 = vmatpush1.msra.mxu0 %v222
    %254 = vmatprep.subr.mxu0 0.0
    %255 = vmatpush1.msra.mxu0 %v223
    %256 = vmatprep.subr.mxu0 0.0
    %257 = vmatpush1.msra.mxu0 0.0
    %258 = vmatprep.subr.mxu0 0.0
    %259 = vmatpush1.msra.mxu0 0.0
    %260 = vmatprep.subr.mxu0 0.0
    %261 = vmatpush1.msra.mxu0 0.0
    %262 = vmatprep.subr.mxu0 0.0
    %263 = vmatpush1.msra.mxu0 0.0
    %264 = vmatprep.subr.mxu0 0.0
    %265 = vmatpush1.msra.mxu0 0.0
    %266 = vmatprep.subr.mxu0 0.0
    %267 = vmatpush1.msra.mxu0 0.0
    %268 = vmatprep.subr.mxu0 0.0
    %269 = vmatpush1.msra.mxu0 0.0
    %270 = vmatprep.subr.mxu0 0.0
    %271 = vmatpush1.msra.mxu0 0.0
    %272 = vmatprep.subr.mxu0 0.0
    %273 = vmatpush1.msra.mxu0 0.0
    %274 = vmatprep.subr.mxu0 0.0
    %275 = vmatpush1.msra.mxu0 0.0
    %276 = vmatprep.subr.mxu0 0.0
    %277 = vmatpush1.msra.mxu0 0.0
    %278 = vmatprep.subr.mxu0 0.0
    %279 = vmatpush1.msra.mxu0 0.0
    %280 = vmatprep.subr.mxu0 0.0
    %281 = vmatpush1.msra.mxu0 0.0
    %282 = vmatprep.subr.mxu0 0.0
    %283 = vmatpush1.msra.mxu0 0.0
    %284 = vmatprep.subr.mxu0 0.0
    %285 = vmatpush1.msra.mxu0 0.0
    %286 = vmatprep.subr.mxu0 0.0
    %287 = vmatpush1.msra.mxu0 0.0
    %288 = vmatprep.mubr.f32.mxu0 0.0
    %289 = vmatmul.mubr.f32.gmra.mrb[0].mxu0 %v206
    %v290 = vpop.f32.mrb[0].mxu0
    %v291 = vadd.f32 %v30, %v290
    %v292 = vpop.f32.mrb[0].mxu0
    %293 = vdwg.mxu0
    %294 = vst [vmem:[%s3] sm:$0xff] %v291
    // Predicated region
    $region18: #{_lambda_.1} parent=1 // pred_check
      _
    $region19: #{_lambda_.1} parent=1 // pred_check_branch
      %296 = sbr.rel (0) target = $region21
    $region20: #{_lambda_.1} parent=1 // pred_region
      _
    $region21: #{_lambda_.1} parent=1 // pred_fallthru
      _
    // Predicated region
    $region22: #{_lambda_.1} parent=1 // pred_check
      _
    $region23: #{_lambda_.1} parent=1 // pred_check_branch
      %298 = sbr.rel (0) target = $region25
    $region24: #{_lambda_.1} parent=1 // pred_region
      _
    $region25: #{_lambda_.1} parent=1 // pred_fallthru
      _
    %299 = vsyncpa [#allocation3], 1

</llo_original>
